<compile_context>
chip_gen: v5e
topology: v5e:2x2
jax: 0.10.0
libtpu: 0.0.40
codegen_flags: <defaults>
</compile_context>

<pallas_src>
import functools

import jax
import jax.numpy as jnp
from jax.experimental import pallas as pl
from jax.experimental.pallas import tpu as pltpu


def _pixelhead_kernel(w_ref, b_ref, x_ref, o_ref):
    # w_ref: (C_out, C_in), b_ref: (C_out, 1), x_ref: (C_in, TM), o_ref: (C_out, TM)
    acc = jnp.dot(w_ref[...], x_ref[...], preferred_element_type=jnp.float32)
    o_ref[...] = (acc + b_ref[...]).astype(o_ref.dtype)


def pixelhead_forward(x_ncdhw, weight, bias, *, tm=32768):
    """x_ncdhw: (N, C_in, D, H, W); weight: (C_out, C_in, 1, 1, 1); bias: (C_out,)."""
    n, c_in, d, h, w = x_ncdhw.shape
    c_out = weight.shape[0]
    m_spatial = d * h * w

    # NCDHW -> (N, C_in, DHW): pure reshape, no transpose / extra HBM traffic.
    x3d = x_ncdhw.reshape(n, c_in, m_spatial)

    # Spatial tile lives on the lane axis. If it covers the full spatial extent
    # a single full-dim block is always legal; otherwise keep it a multiple of
    # 128 lanes and zero-pad the ragged tail.
    tm_eff = min(tm, m_spatial)
    if tm_eff < m_spatial:
        tm_eff = max(128, (tm_eff // 128) * 128)
        pad = (-m_spatial) % tm_eff
        if pad:
            x3d = jnp.pad(x3d, ((0, 0), (0, 0), (0, pad)))
    else:
        pad = 0
    m_padded = m_spatial + pad
    grid = (n, m_padded // tm_eff)

    w2d = weight.reshape(c_out, c_in)        # (C_out, C_in)
    b2d = bias.reshape(c_out, 1)             # (C_out, 1) broadcasts across lanes

    out3d = pl.pallas_call(
        _pixelhead_kernel,
        out_shape=jax.ShapeDtypeStruct((n, c_out, m_padded), x_ncdhw.dtype),
        grid_spec=pltpu.PrefetchScalarGridSpec(
            num_scalar_prefetch=0,
            grid=grid,
            in_specs=[
                pl.BlockSpec((c_out, c_in), lambda b, i: (0, 0)),
                pl.BlockSpec((c_out, 1), lambda b, i: (0, 0)),
                pl.BlockSpec((None, c_in, tm_eff), lambda b, i: (b, 0, i)),
            ],
            out_specs=pl.BlockSpec((None, c_out, tm_eff), lambda b, i: (b, 0, i)),
        ),
        compiler_params=pltpu.CompilerParams(
            dimension_semantics=("parallel", "parallel")),
    )(w2d, b2d, x3d)

    if pad:
        out3d = out3d[:, :, :m_spatial]
    # (N, C_out, DHW) is already NCDHW order — free reshape back.
    return out3d.reshape(n, c_out, d, h, w)


def init_pixelhead_params(key, in_dim, out_dim, dtype=jnp.float32):
    """Deterministic params matching nn.Conv3d(in_dim, out_dim, kernel_size=1)
    with kaiming_normal_(mode='fan_out') weight init."""
    kw, kb = jax.random.split(key)
    fan_out = out_dim * 1 * 1 * 1
    std = (2.0 / fan_out) ** 0.5
    weight = std * jax.random.normal(kw, (out_dim, in_dim, 1, 1, 1), dtype)
    # PyTorch default conv bias: U(-1/sqrt(fan_in), 1/sqrt(fan_in)), fan_in = in_dim.
    bound = 1.0 / (in_dim ** 0.5)
    bias = jax.random.uniform(kb, (out_dim,), dtype, -bound, bound)
    return weight, bias


def _reference(x, weight, bias):
    # Pure-JAX reference for the 1x1x1 conv.
    w2d = weight.reshape(weight.shape[0], weight.shape[1])
    y = jnp.einsum('ncdhw,oc->nodhw', x, w2d) + bias[None, :, None, None, None]
    return y


if __name__ == "__main__":
    key = jax.random.PRNGKey(0)
    k_x, k_p = jax.random.split(key)

    N, C_IN, C_OUT, D, H, W = 2, 4, 8, 8, 8, 8   # DHW = 512 pixels per batch
    x = jax.random.normal(k_x, (N, C_IN, D, H, W), jnp.float32)
    weight, bias = init_pixelhead_params(k_p, C_IN, C_OUT)

    fwd = jax.jit(functools.partial(pixelhead_forward, tm=32768))
    y = fwd(x, weight, bias)
    jax.block_until_ready(y)

    y_ref = _reference(x, weight, bias)
    assert y.shape == (N, C_OUT, D, H, W)
    assert jnp.allclose(y, y_ref, atol=1e-5, rtol=1e-5)

    print("KERNEL_OK")
</pallas_src>

<mosaic_0001>
module attributes {stable_mosaic.version = 11 : i64} {
  func.func @_pixelhead_kernel(%arg0: i32, %arg1: i32, %arg2: memref<8x4xf32, #tpu.memory_space<vmem>>, %arg3: memref<8x1xf32, #tpu.memory_space<vmem>>, %arg4: memref<1x4x512xf32, #tpu.memory_space<vmem>>, %arg5: memref<1x8x512xf32, #tpu.memory_space<vmem>>) attributes {dimension_semantics = [#tpu.dimension_semantics<parallel>, #tpu.dimension_semantics<parallel>], iteration_bounds = array<i64: 2, 1>, scalar_prefetch = 0 : i64, scratch_operands = 0 : i64, tpu.core_type = #tpu.core_type<tc>, window_params = [{pipeline_mode = #tpu.pipeline_mode<synchronous>, transform_indices = @transform_0, window_bounds = array<i64: 8, 4>}, {pipeline_mode = #tpu.pipeline_mode<synchronous>, transform_indices = @transform_1, window_bounds = array<i64: 8, 1>}, {transform_indices = @transform_2, window_bounds = array<i64: 1, 4, 512>}, {transform_indices = @transform_3, window_bounds = array<i64: 1, 8, 512>}]} {
    %c0 = arith.constant 0 : index
    %c0_0 = arith.constant 0 : index
    %0 = vector.load %arg2[%c0, %c0_0] : memref<8x4xf32, #tpu.memory_space<vmem>>, vector<8x4xf32>
    %c0_1 = arith.constant 0 : index
    %c0_2 = arith.constant 0 : index
    %c0_3 = arith.constant 0 : index
    %1 = vector.load %arg4[%c0_1, %c0_2, %c0_3] : memref<1x4x512xf32, #tpu.memory_space<vmem>>, vector<1x4x512xf32>
    %2 = vector.shape_cast %1 : vector<1x4x512xf32> to vector<4x512xf32>
    %cst = arith.constant dense<0.000000e+00> : vector<8x512xf32>
    %3 = tpu.matmul %0, %2, %cst {dimension_numbers = #tpu.dot_dimension_numbers<[1], [0], [0], [1], [0, 0, 1, 1], [], []>} : vector<8x4xf32>, vector<4x512xf32>, vector<8x512xf32> -> vector<8x512xf32>
    %c0_4 = arith.constant 0 : index
    %c0_5 = arith.constant 0 : index
    %4 = vector.load %arg3[%c0_4, %c0_5] : memref<8x1xf32, #tpu.memory_space<vmem>>, vector<8x1xf32>
    %5 = vector.broadcast %4 : vector<8x1xf32> to vector<8x512xf32>
    %6 = arith.addf %3, %5 : vector<8x512xf32>
    %c0_6 = arith.constant 0 : index
    %c0_7 = arith.constant 0 : index
    %c0_8 = arith.constant 0 : index
    %7 = vector.load %arg5[%c0_6, %c0_7, %c0_8] : memref<1x8x512xf32, #tpu.memory_space<vmem>>, vector<1x8x512xf32>
    %8 = vector.shape_cast %7 : vector<1x8x512xf32> to vector<8x512xf32>
    %9 = vector.shape_cast %6 : vector<8x512xf32> to vector<1x8x512xf32>
    tpu.vector_store %arg5[%c0_6, %c0_7, %c0_8], %9 {strides = array<i32>} : memref<1x8x512xf32, #tpu.memory_space<vmem>>, vector<1x8x512xf32>,
    return
  }
  func.func @transform_0(%arg0: i32, %arg1: i32) -> (i32, i32) {
    %c0_i32 = arith.constant 0 : i32
    %c0_i32_0 = arith.constant 0 : i32
    %c0_i32_1 = arith.constant 0 : i32
    return %c0_i32, %c0_i32_0 : i32, i32
  }
  func.func @transform_1(%arg0: i32, %arg1: i32) -> (i32, i32) {
    %c0_i32 = arith.constant 0 : i32
    %c0_i32_0 = arith.constant 0 : i32
    %c0_i32_1 = arith.constant 0 : i32
    return %c0_i32, %c0_i32_0 : i32, i32
  }
  func.func @transform_2(%arg0: i32, %arg1: i32) -> (i32, i32, i32) {
    %c0_i32 = arith.constant 0 : i32
    %c0_i32_0 = arith.constant 0 : i32
    return %arg0, %c0_i32, %arg1 : i32, i32, i32
  }
  func.func @transform_3(%arg0: i32, %arg1: i32) -> (i32, i32, i32) {
    %c0_i32 = arith.constant 0 : i32
    %c0_i32_0 = arith.constant 0 : i32
    return %arg0, %c0_i32, %arg1 : i32, i32, i32
  }
}

</mosaic_0001>

<llo_original>
// kernel: pixelhead_forward.1
$region0: #{pixelhead_forward.1}
  #allocation0 [shape = 'u32[]', space=smem, size = 0x4, offset = 0x4, fixed_abs, tag = 'smem constant byte address 0x4 - core index']
  #allocation1 [shape = 'u32[72,128]{1,0:T(1,128)}', space=vmem, size = 0x9000, scoped, tag = 'internal scratch']
  %s0 = inlined_call_operand.vmem [shape: f32[8,4], index: 0, kind: input, shape index: {}]
  %s1 = inlined_call_operand.vmem [shape: f32[8,1], index: 1, kind: input, shape index: {}]
  %s2 = inlined_call_operand.vmem [shape: f32[2,4,512], index: 2, kind: input, shape index: {}]
  %s3 = inlined_call_operand.vmem [shape: f32[2,8,512], index: 3, kind: output, shape index: {}]
  %s4 = sld [smem:[#allocation0]]
  $region45: #{pixelhead_forward.1} parent=0
    _
  %s6 = ssub.s32 1, %s4
  %s7 = scalar_select 0, %s6, %s4
  loop: start=0, step=1, limit=4
  $region2: #{pixelhead_forward.1} parent=0 // loop_pre_header
    _
  $region3: #{pixelhead_forward.1} parent=0 // loop_header
    %s9 = sphi 0, %s13
    %p10 = scmp.ge.s32.totalorder %s9, 4
    %s16 = sphi 0, %s28
    %s17 = sphi 0, %s24
    %s18 = sphi 0, %s16
    %s19 = sphi 0, %s17
    %s20 = sphi 0, %s18
    %s21 = sphi 0, %s19
    %s29 = sphi 0, %s29
    %s31 = sphi 0, %s29
    %s32 = sphi 0, %s31
    %s46 = sphi 0, %s32
    %s50 = sphi 0, %s50
    %s52 = sphi 0, %s50
    %s53 = sphi 0, %s52
    %s67 = sphi 0, %s53
    %s75 = sphi 0, %s77
    %s78 = sphi 0, %s75
    %s79 = sphi 0, %s78
    %s95 = sphi 0, %s79
    %s103 = sphi 0, %s105
    %s106 = sphi 0, %s103
    %s107 = sphi 0, %s106
    %s123 = sphi 0, %s107
  $region4: #{pixelhead_forward.1} parent=0 // loop_header_branch
    %12 = sbr.rel (%p10) target = $region8
  $region5: #{pixelhead_forward.1} parent=0 // loop_body
    %s14 = ssub.s32 %s9, 1
    %s15 = ssub.s32 %s9, 2
    %s22 = sadd.s32 1, %s17
    %p23 = scmp.ge.s32.totalorder %s22, 1
    %s24 = scalar_select %p23, 0, %s22
    %s25 = sadd.s32 1, %s16
    %s26 = scalar_select %p23, %s25, %s16
    %p27 = scmp.ge.s32.totalorder %s26, 2
    %s28 = scalar_select %p27, 0, %s26
    %s30 = sadd.s32 %s29, 1
    %p33 = scmp.eq.s32.totalorder %s9, 1
    %p34 = scmp.ne.s32.totalorder %s29, %s31
    %p35 = scmp.eq.s32.totalorder %s9, 0
    %p36 = por %p34, %p35
    %p37 = scmp.ne.s32.totalorder %s29, %s31
    %p38 = scmp.eq.s32.totalorder %s14, 1
    %p39 = por %p37, %p38
    %p40 = scmp.ne.s32.totalorder %s31, %s32
    %p41 = scmp.eq.s32.totalorder %s14, 0
    %p42 = por %p40, %p41
    %p43 = scmp.ne.s32.totalorder %s31, %s32
    %p44 = scmp.eq.s32.totalorder %s15, 1
    %p45 = por %p43, %p44
    %p47 = scmp.ne.s32.totalorder %s32, %s46
    %p48 = scmp.eq.s32.totalorder %s15, 0
    %p49 = por %p47, %p48
    %s51 = sadd.s32 %s50, 1
    %p54 = scmp.eq.s32.totalorder %s9, 1
    %p55 = scmp.ne.s32.totalorder %s50, %s52
    %p56 = scmp.eq.s32.totalorder %s9, 0
    %p57 = por %p55, %p56
    %p58 = scmp.ne.s32.totalorder %s50, %s52
    %p59 = scmp.eq.s32.totalorder %s14, 1
    %p60 = por %p58, %p59
    %p61 = scmp.ne.s32.totalorder %s52, %s53
    %p62 = scmp.eq.s32.totalorder %s14, 0
    %p63 = por %p61, %p62
    %p64 = scmp.ne.s32.totalorder %s52, %s53
    %p65 = scmp.eq.s32.totalorder %s15, 1
    %p66 = por %p64, %p65
    %p68 = scmp.ne.s32.totalorder %s53, %s67
    %p69 = scmp.eq.s32.totalorder %s15, 0
    %p70 = por %p68, %p69
    %s71 = ssub.s32 %s16, %s28
    %s72 = ssub.s32 %s17, %s24
    %s73 = sor.u32 %s71, %s72
    %p74 = scmp.eq.s32.totalorder %s73, 0
    %s76 = sadd.s32 %s75, 1
    %s77 = scalar_select %p74, %s75, %s76
    %p80 = pneg %p74
    %p81 = scmp.eq.s32.totalorder %s9, 1
    %p82 = por %p80, %p81
    %p83 = scmp.ne.s32.totalorder %s75, %s78
    %p84 = scmp.eq.s32.totalorder %s9, 0
    %p85 = por %p83, %p84
    %p86 = scmp.ne.s32.totalorder %s75, %s78
    %p87 = scmp.eq.s32.totalorder %s14, 1
    %p88 = por %p86, %p87
    %p89 = scmp.ne.s32.totalorder %s78, %s79
    %p90 = scmp.eq.s32.totalorder %s14, 0
    %p91 = por %p89, %p90
    %p92 = scmp.ne.s32.totalorder %s78, %s79
    %p93 = scmp.eq.s32.totalorder %s15, 1
    %p94 = por %p92, %p93
    %p96 = scmp.ne.s32.totalorder %s79, %s95
    %p97 = scmp.eq.s32.totalorder %s15, 0
    %p98 = por %p96, %p97
    %s99 = ssub.s32 %s16, %s28
    %s100 = ssub.s32 %s17, %s24
    %s101 = sor.u32 %s99, %s100
    %p102 = scmp.eq.s32.totalorder %s101, 0
    %s104 = sadd.s32 %s103, 1
    %s105 = scalar_select %p102, %s103, %s104
    %p108 = pneg %p102
    %p109 = scmp.eq.s32.totalorder %s9, 1
    %p110 = por %p108, %p109
    %p111 = scmp.ne.s32.totalorder %s103, %s106
    %p112 = scmp.eq.s32.totalorder %s9, 0
    %p113 = por %p111, %p112
    %p114 = scmp.ne.s32.totalorder %s103, %s106
    %p115 = scmp.eq.s32.totalorder %s14, 1
    %p116 = por %p114, %p115
    %p117 = scmp.ne.s32.totalorder %s106, %s107
    %p118 = scmp.eq.s32.totalorder %s14, 0
    %p119 = por %p117, %p118
    %p120 = scmp.ne.s32.totalorder %s106, %s107
    %p121 = scmp.eq.s32.totalorder %s15, 1
    %p122 = por %p120, %p121
    %p124 = scmp.ne.s32.totalorder %s107, %s123
    %p125 = scmp.eq.s32.totalorder %s15, 0
    %p126 = por %p124, %p125
    %p127 = scmp.le.s32.totalorder 1, %s9
    %p128 = scmp.lt.s32.totalorder %s9, 3
    %p129 = pnand %p127, %p128
    %p130 = pneg %p129
    // Predicated region
    $region9: #{pixelhead_forward.1} parent=5 // pred_check
      _
    $region10: #{pixelhead_forward.1} parent=5 // pred_check_branch
      %132 = sbr.rel (%p129) target = $region12
    $region11: #{pixelhead_forward.1} parent=5 // pred_region
      %s133 = ssub.s32 %s9, 1
      // Predicated region
      $region13: #{pixelhead_forward.1} parent=11 // pred_check
        %p134 = pneg %p42
      $region14: #{pixelhead_forward.1} parent=11 // pred_check_branch
        %136 = sbr.rel (%p134) target = $region16
      $region15: #{pixelhead_forward.1} parent=11 // pred_region
        _
      $region16: #{pixelhead_forward.1} parent=11 // pred_fallthru
        _
      // Predicated region
      $region17: #{pixelhead_forward.1} parent=11 // pred_check
        %p137 = pneg %p63
      $region18: #{pixelhead_forward.1} parent=11 // pred_check_branch
        %139 = sbr.rel (%p137) target = $region20
      $region19: #{pixelhead_forward.1} parent=11 // pred_region
        _
      $region20: #{pixelhead_forward.1} parent=11 // pred_fallthru
        _
    $region12: #{pixelhead_forward.1} parent=5 // pred_fallthru
      _
    %p140 = scmp.lt.s32.totalorder %s9, 2
    // Predicated region
    $region21: #{pixelhead_forward.1} parent=5 // pred_check
      %p141 = pneg %p140
    $region22: #{pixelhead_forward.1} parent=5 // pred_check_branch
      %143 = sbr.rel (%p141) target = $region24
    $region23: #{pixelhead_forward.1} parent=5 // pred_region
      // Predicated region
      $region25: #{pixelhead_forward.1} parent=23 // pred_check
        %p144 = pneg %p85
      $region26: #{pixelhead_forward.1} parent=23 // pred_check_branch
        %146 = sbr.rel (%p144) target = $region28
      $region27: #{pixelhead_forward.1} parent=23 // pred_region
        %s147 = smul.u32 4, %s17
        %p148 = scmp.lt.s32.totalorder %s16, 1
        %s149 = scalar_select %p148, %s16, 1
        %p150 = scmp.lt.s32.totalorder %s147, 3
        %s151 = scalar_select %p150, %s147, 3
        %s152 = smul.addr %s149, 4
        %s153 = sadd.s32 %s151, %s152
        %s154 = smul.addr %s153, 4
        %s155 = scalar_lea.vmem %s2, %s154
        %s156 = smul.u32 4, %s17
      $region28: #{pixelhead_forward.1} parent=23 // pred_fallthru
        _
    $region24: #{pixelhead_forward.1} parent=5 // pred_fallthru
      _
    %p157 = scmp.le.s32.totalorder 1, %s9
    %p158 = scmp.lt.s32.totalorder %s9, 3
    %p159 = pnand %p157, %p158
    %p160 = pneg %p159
    // Predicated region
    $region29: #{pixelhead_forward.1} parent=5 // pred_check
      _
    $region30: #{pixelhead_forward.1} parent=5 // pred_check_branch
      %162 = sbr.rel (%p159) target = $region32
    $region31: #{pixelhead_forward.1} parent=5 // pred_region
      %s163 = ssub.s32 %s9, 1
      %p164 = pneg %p42
      %p165 = pneg %p39
      %p166 = pneg %p63
      %p167 = pneg %p60
      %s168 = smul.u32 4, %s19
      %p169 = scmp.lt.s32.totalorder %s18, 1
      %s170 = scalar_select %p169, %s18, 1
      %p171 = scmp.lt.s32.totalorder %s168, 3
      %s172 = scalar_select %p171, %s168, 3
      %s173 = smul.addr %s170, 4
      %s174 = sadd.s32 %s172, %s173
      %s175 = smul.addr %s174, 4
      %s176 = scalar_lea.vmem %s2, %s175
      %p177 = pneg %p91
      %p178 = pneg %p88
      %p179 = pneg %p119
      %p180 = pneg %p116
      %s181 = smul.u32 4, %s19
      %p182 = scmp.lt.s32.totalorder %s18, 1
      %s183 = scalar_select %p182, %s18, 1
      %p184 = scmp.lt.s32.totalorder %s181, 3
      %s185 = scalar_select %p184, %s181, 3
      %s186 = smul.addr %s183, 4
      %s187 = sadd.s32 %s185, %s186
      %s188 = smul.addr %s187, 8
      %s189 = scalar_lea.vmem %s3, %s188
      %s190 = smul.u32 4, %s19
      %p191 = scmp.lt.s32.totalorder %s18, 1
      %s192 = scalar_select %p191, %s18, 1
      %p193 = scmp.lt.s32.totalorder %s190, 3
      %s194 = scalar_select %p193, %s190, 3
      %s195 = smul.addr %s192, 4
      %s196 = sadd.s32 %s194, %s195
      %s197 = smul.addr %s196, 4
      %s198 = scalar_lea.vmem %s2, %s197
      %s199 = smul.u32 4, %s19
      %s200 = smul.u32 4, %s19
      %p201 = scmp.lt.s32.totalorder %s18, 1
      %s202 = scalar_select %p201, %s18, 1
      %p203 = scmp.lt.s32.totalorder %s200, 3
      %s204 = scalar_select %p203, %s200, 3
      %s205 = smul.addr %s202, 4
      %s206 = sadd.s32 %s204, %s205
      %s207 = smul.addr %s206, 8
      %s208 = scalar_lea.vmem %s3, %s207
      %s209 = smul.u32 4, %s19
      %v210 = vld [vmem:[%s0] sm:$0xff]
      %v211 = vld [vmem:[%s198] sm:$0xff]
      %v212 = vld [vmem:[%s198 + $0x8] sm:$0xff]
      %v213 = vld [vmem:[%s1] sm:$0xff]
      %215 = vset.pattern.permute.xlu0 0
      %216 = vperm.xlu0 %215, %v213
      %v217 = vpop.permute.xlu0 %216
      %221 = vst [vmem:[#allocation1] ss:$2 sm:$0xff] %v211
      %s222 = scalar_lea.vmem [#allocation1], 16
      %223 = vst [vmem:[%s222] ss:$2 sm:$0xff] %v212
      %v224 = vld.sshfl [vmem:[#allocation1] sm:$0xff pattern:$0x75316420]
      %v225 = vld.sshfl [vmem:[#allocation1 + $0x8] sm:$0xff pattern:$0x75316420]
      %v226 = vld.sshfl [vmem:[#allocation1 + $0x10] sm:$0xff pattern:$0x75316420]
      %v227 = vld.sshfl [vmem:[#allocation1 + $0x18] sm:$0xff pattern:$0x75316420]
      %vm228 = vcmask 31744
      %v230 = vsel %vm228, %v210, 0
      %vm232 = vcmask 1043456
      %v233 = vsel %vm232, %v224, 0
      %v235 = vsel %vm232, %v225, 0
      %v237 = vsel %vm232, %v226, 0
      %v239 = vsel %vm232, %v227, 0
      %241 = vmatpush.msra.mxu0 0.0
      %242 = vmatpush.msra.mxu0 0.0
      %243 = vmatpush.msra.mxu0 0.0
      %244 = vmatpush.msra.mxu0 0.0
      %245 = vmatpush.msra.mxu0 0.0
      %246 = vmatpush.msra.mxu0 0.0
      %247 = vmatpush.msra.mxu0 0.0
      %248 = vmatpush.msra.mxu0 0.0
      %249 = vmatpush.msra.mxu0 0.0
      %250 = vmatpush.msra.mxu0 0.0
      %251 = vmatpush.msra.mxu0 0.0
      %252 = vmatpush.msra.mxu0 0.0
      %253 = vmatpush.msra.mxu0 0.0
      %254 = vmatpush.msra.mxu0 0.0
      %255 = vmatpush.msra.mxu0 0.0
      %256 = vmatpush.msra.mxu0 %v233
      %257 = vmatmul.f32.gmra.mxu0 %v230
      %v258 = vpop.f32.mrf.mxu0
      %v259 = vadd.f32 %v217, %v258
      %260 = vdwg.mxu0
      %261 = vmatpush.msra.mxu0 0.0
      %262 = vmatpush.msra.mxu0 0.0
      %263 = vmatpush.msra.mxu0 0.0
      %264 = vmatpush.msra.mxu0 0.0
      %265 = vmatpush.msra.mxu0 0.0
      %266 = vmatpush.msra.mxu0 0.0
      %267 = vmatpush.msra.mxu0 0.0
      %268 = vmatpush.msra.mxu0 0.0
      %269 = vmatpush.msra.mxu0 0.0
      %270 = vmatpush.msra.mxu0 0.0
      %271 = vmatpush.msra.mxu0 0.0
      %272 = vmatpush.msra.mxu0 0.0
      %273 = vmatpush.msra.mxu0 0.0
      %274 = vmatpush.msra.mxu0 0.0
      %275 = vmatpush.msra.mxu0 0.0
      %276 = vmatpush.msra.mxu0 %v235
      %277 = vmatmul.f32.gmra.mxu0 %v230
      %v278 = vpop.f32.mrf.mxu0
      %v279 = vadd.f32 %v217, %v278
      %280 = vdwg.mxu0
      %281 = vmatpush.msra.mxu0 0.0
      %282 = vmatpush.msra.mxu0 0.0
      %283 = vmatpush.msra.mxu0 0.0
      %284 = vmatpush.msra.mxu0 0.0
      %285 = vmatpush.msra.mxu0 0.0
      %286 = vmatpush.msra.mxu0 0.0
      %287 = vmatpush.msra.mxu0 0.0
      %288 = vmatpush.msra.mxu0 0.0
      %289 = vmatpush.msra.mxu0 0.0
      %290 = vmatpush.msra.mxu0 0.0
      %291 = vmatpush.msra.mxu0 0.0
      %292 = vmatpush.msra.mxu0 0.0
      %293 = vmatpush.msra.mxu0 0.0
      %294 = vmatpush.msra.mxu0 0.0
      %295 = vmatpush.msra.mxu0 0.0
      %296 = vmatpush.msra.mxu0 %v237
      %297 = vmatmul.f32.gmra.mxu0 %v230
      %v298 = vpop.f32.mrf.mxu0
      %v299 = vadd.f32 %v217, %v298
      %300 = vdwg.mxu0
      %301 = vmatpush.msra.mxu0 0.0
      %302 = vmatpush.msra.mxu0 0.0
      %303 = vmatpush.msra.mxu0 0.0
      %304 = vmatpush.msra.mxu0 0.0
      %305 = vmatpush.msra.mxu0 0.0
      %306 = vmatpush.msra.mxu0 0.0
      %307 = vmatpush.msra.mxu0 0.0
      %308 = vmatpush.msra.mxu0 0.0
      %309 = vmatpush.msra.mxu0 0.0
      %310 = vmatpush.msra.mxu0 0.0
      %311 = vmatpush.msra.mxu0 0.0
      %312 = vmatpush.msra.mxu0 0.0
      %313 = vmatpush.msra.mxu0 0.0
      %314 = vmatpush.msra.mxu0 0.0
      %315 = vmatpush.msra.mxu0 0.0
      %316 = vmatpush.msra.mxu0 %v239
      %317 = vmatmul.f32.gmra.mxu0 %v230
      %v318 = vpop.f32.mrf.mxu0
      %v319 = vadd.f32 %v217, %v318
      %320 = vdwg.mxu0
      %321 = vst [vmem:[%s208] sm:$0xff] %v259
      %322 = vst [vmem:[%s208 + $0x8] sm:$0xff] %v279
      %323 = vst [vmem:[%s208 + $0x10] sm:$0xff] %v299
      %324 = vst [vmem:[%s208 + $0x18] sm:$0xff] %v319
      %s325 = smul.u32 4, %s19
      %p326 = scmp.lt.s32.totalorder %s18, 1
      %s327 = scalar_select %p326, %s18, 1
      %p328 = scmp.lt.s32.totalorder %s325, 3
      %s329 = scalar_select %p328, %s325, 3
      %s330 = smul.addr %s327, 4
      %s331 = sadd.s32 %s329, %s330
      %s332 = smul.addr %s331, 8
      %s333 = scalar_lea.vmem %s3, %s332
      // Predicated region
      $region33: #{pixelhead_forward.1} parent=31 // pred_check
        %p334 = pneg %p116
      $region34: #{pixelhead_forward.1} parent=31 // pred_check_branch
        %336 = sbr.rel (%p334) target = $region36
      $region35: #{pixelhead_forward.1} parent=31 // pred_region
        %s337 = smul.u32 4, %s19
      $region36: #{pixelhead_forward.1} parent=31 // pred_fallthru
        _
    $region32: #{pixelhead_forward.1} parent=5 // pred_fallthru
      _
    %p338 = scmp.le.s32.totalorder 2, %s9
    // Predicated region
    $region37: #{pixelhead_forward.1} parent=5 // pred_check
      %p339 = pneg %p338
    $region38: #{pixelhead_forward.1} parent=5 // pred_check_branch
      %341 = sbr.rel (%p339) target = $region40
    $region39: #{pixelhead_forward.1} parent=5 // pred_region
      %s342 = ssub.s32 %s9, 2
      // Predicated region
      $region41: #{pixelhead_forward.1} parent=39 // pred_check
        %p343 = pneg %p122
      $region42: #{pixelhead_forward.1} parent=39 // pred_check_branch
        %345 = sbr.rel (%p343) target = $region44
      $region43: #{pixelhead_forward.1} parent=39 // pred_region
        %s346 = smul.u32 4, %s21
        %p347 = scmp.lt.s32.totalorder %s20, 1
        %s348 = scalar_select %p347, %s20, 1
        %p349 = scmp.lt.s32.totalorder %s346, 3
        %s350 = scalar_select %p349, %s346, 3
        %s351 = smul.addr %s348, 4
        %s352 = sadd.s32 %s350, %s351
        %s353 = smul.addr %s352, 8
        %s354 = scalar_lea.vmem %s3, %s353
      $region44: #{pixelhead_forward.1} parent=39 // pred_fallthru
        _
    $region40: #{pixelhead_forward.1} parent=5 // pred_fallthru
      _
  $region6: #{pixelhead_forward.1} parent=0 // loop_footer
    %s13 = sadd.s32 1, %s9
  $region7: #{pixelhead_forward.1} parent=0 // loop_footer_branch
    %8 = sbr.rel target = $region3
  $region8: #{pixelhead_forward.1} parent=0 // loop_exit
    _

</llo_original>
